<compile_context>
chip_gen: v5e
topology: v5e:2x2
jax: 0.10.0
libtpu: 0.0.40
codegen_flags: <defaults>
</compile_context>

<pallas_src>
import functools

import jax
import jax.numpy as jnp
from jax.experimental import pallas as pl
from jax.experimental.pallas import tpu as pltpu


LANE = 128      # TPU lane width: lane-dense output + padded parameter slab
SUBLANE = 8     # sublane granularity for row padding


def _mlp_kernel(x_ref, p_ref, o_ref, *, in_features, hidden):
    """x_ref: (TB, in_features) f32
       p_ref: (rows_padded, LANE) packed parameter slab
              rows [0, in_features)                      -> W1 rows (in -> hidden)
              row  in_features                           -> b1
              rows [in_features+1, in_features+1+hidden) -> W2 rows (hidden -> out)
              row  in_features+1+hidden                  -> b2
       o_ref: (TB, LANE) lane-dense output (real outputs in lanes [0, out))"""
    x = x_ref[...]                              # (TB, in_features)
    tb = x_ref.shape[0]
    lane = p_ref.shape[1]

    # ---- fc1 + ReLU as VPU rank-1 broadcast FMAs (no MXU for K=3, N=4) ----
    h = jnp.broadcast_to(p_ref[in_features:in_features + 1, :], (tb, lane))
    for k in range(in_features):                # static, fully unrolled (3 iters)
        h = h + x[:, k:k + 1] * p_ref[k:k + 1, :]
    h = jnp.maximum(h, 0.0)                     # padded lanes stay exactly 0

    # ---- fc2 as VPU rank-1 broadcast FMAs (K=4, N=4) ----
    w2_row0 = in_features + 1
    o = jnp.broadcast_to(p_ref[w2_row0 + hidden:w2_row0 + hidden + 1, :], (tb, lane))
    for k in range(hidden):                     # static, fully unrolled (4 iters)
        o = o + h[:, k:k + 1] * p_ref[w2_row0 + k:w2_row0 + k + 1, :]

    o_ref[...] = o.astype(o_ref.dtype)


def pack_params(w1_t, b1, w2_t, b2):
    """Pack all parameters into a single (rows_padded, LANE) f32 slab."""
    in_f, hidden = w1_t.shape
    _, out_f = w2_t.shape
    rows = in_f + 1 + hidden + 1
    rows_padded = ((rows + SUBLANE - 1) // SUBLANE) * SUBLANE
    slab = jnp.zeros((rows_padded, LANE), jnp.float32)
    slab = slab.at[0:in_f, 0:hidden].set(w1_t)
    slab = slab.at[in_f, 0:hidden].set(b1.reshape(-1))
    slab = slab.at[in_f + 1:in_f + 1 + hidden, 0:out_f].set(w2_t)
    slab = slab.at[in_f + 1 + hidden, 0:out_f].set(b2.reshape(-1))
    return slab


def fully_connected_forward(x, params, *, in_features, hidden, out_features, tb=None):
    """x: (B, in_features) f32, params: packed slab from pack_params -> (B, out_features)"""
    B = x.shape[0]
    if tb is None:
        # Whole batch in one block while small; cap so huge batches still pipeline.
        # (At LANE-padded f32 even TB=1024 is ~0.5 MiB/buffer -> fits v7x's 32 MiB
        #  scoped VMEM default with room to spare, no vmem_limit_bytes needed.)
        tb = B if B <= 1024 else 1024

    grid = (pl.cdiv(B, tb),)
    kernel = functools.partial(_mlp_kernel, in_features=in_features, hidden=hidden)

    out_padded = pl.pallas_call(
        kernel,
        out_shape=jax.ShapeDtypeStruct((B, LANE), x.dtype),
        grid=grid,
        in_specs=[
            pl.BlockSpec((tb, in_features), lambda i: (i, 0)),   # batch-tiled x
            pl.BlockSpec(params.shape, lambda i: (0, 0)),        # params resident
        ],
        out_specs=pl.BlockSpec((tb, LANE), lambda i: (i, 0)),    # lane-dense output
        compiler_params=pltpu.CompilerParams(
            dimension_semantics=("parallel",)),                  # megacore on v7x
    )(x, params)

    # Slice the real features back out (cheap XLA slice outside the kernel).
    return out_padded[:, :out_features]


def init_params(key, input_layer=3, hidden_layer=4, out_layer=4):
    """Deterministic init mirroring nn.Linear's uniform(-1/sqrt(fan_in), 1/sqrt(fan_in))."""
    k1, k2, k3, k4 = jax.random.split(key, 4)
    bound1 = 1.0 / jnp.sqrt(input_layer)
    bound2 = 1.0 / jnp.sqrt(hidden_layer)
    # stored already transposed: (in, out)
    w1_t = jax.random.uniform(k1, (input_layer, hidden_layer), jnp.float32,
                              minval=-bound1, maxval=bound1)
    b1 = jax.random.uniform(k2, (1, hidden_layer), jnp.float32,
                            minval=-bound1, maxval=bound1)
    w2_t = jax.random.uniform(k3, (hidden_layer, out_layer), jnp.float32,
                              minval=-bound2, maxval=bound2)
    b2 = jax.random.uniform(k4, (1, out_layer), jnp.float32,
                            minval=-bound2, maxval=bound2)
    return w1_t, b1, w2_t, b2


if __name__ == "__main__":
    key = jax.random.PRNGKey(0)
    k_x, k_p = jax.random.split(key)

    batch, input_layer, hidden_layer, out_layer = 16, 3, 4, 4
    x = jax.random.normal(k_x, (batch, input_layer), dtype=jnp.float32)
    w1_t, b1, w2_t, b2 = init_params(k_p, input_layer, hidden_layer, out_layer)

    params = pack_params(w1_t, b1, w2_t, b2)

    # TB=8 so the (2,)-grid + "parallel" batch axis is actually exercised.
    out = fully_connected_forward(x, params, in_features=input_layer,
                                  hidden=hidden_layer, out_features=out_layer, tb=8)
    out = jax.block_until_ready(out)

    # Pure-JAX reference check (fc1 -> relu -> fc2)
    ref = jnp.maximum(x @ w1_t + b1, 0.0) @ w2_t + b2
    assert out.shape == (batch, out_layer)
    assert jnp.allclose(out, ref, atol=1e-5, rtol=1e-5)

    print("KERNEL_OK")
</pallas_src>

<mosaic_0001>
module attributes {stable_mosaic.version = 11 : i64} {
  func.func @_mlp_kernel(%arg0: i32, %arg1: memref<8x3xf32, #tpu.memory_space<vmem>>, %arg2: memref<16x128xf32, #tpu.memory_space<vmem>>, %arg3: memref<8x128xf32, #tpu.memory_space<vmem>>) attributes {dimension_semantics = [#tpu.dimension_semantics<parallel>], iteration_bounds = array<i64: 2>, scalar_prefetch = 0 : i64, scratch_operands = 0 : i64, tpu.core_type = #tpu.core_type<tc>, window_params = [{transform_indices = @transform_0, window_bounds = array<i64: 8, 3>}, {pipeline_mode = #tpu.pipeline_mode<synchronous>, transform_indices = @transform_1, window_bounds = array<i64: 16, 128>}, {transform_indices = @transform_2, window_bounds = array<i64: 8, 128>}]} {
    %c0 = arith.constant 0 : index
    %c0_0 = arith.constant 0 : index
    %0 = vector.load %arg1[%c0, %c0_0] : memref<8x3xf32, #tpu.memory_space<vmem>>, vector<8x3xf32>
    %c3 = arith.constant 3 : index
    %c0_1 = arith.constant 0 : index
    %1 = vector.load %arg2[%c3, %c0_1] : memref<16x128xf32, #tpu.memory_space<vmem>>, vector<1x128xf32>
    %2 = vector.shape_cast %1 : vector<1x128xf32> to vector<1x128xf32>
    %3 = vector.broadcast %2 : vector<1x128xf32> to vector<8x128xf32>
    %4 = vector.extract_strided_slice %0 {offsets = [0, 0], sizes = [8, 1], strides = [1, 1]} : vector<8x3xf32> to vector<8x1xf32>
    %c0_2 = arith.constant 0 : index
    %c0_3 = arith.constant 0 : index
    %5 = vector.load %arg2[%c0_2, %c0_3] : memref<16x128xf32, #tpu.memory_space<vmem>>, vector<1x128xf32>
    %6 = vector.broadcast %4 : vector<8x1xf32> to vector<8x128xf32>
    %7 = vector.broadcast %5 : vector<1x128xf32> to vector<8x128xf32>
    %8 = arith.mulf %6, %7 : vector<8x128xf32>
    %9 = arith.addf %3, %8 : vector<8x128xf32>
    %10 = vector.extract_strided_slice %0 {offsets = [0, 1], sizes = [8, 1], strides = [1, 1]} : vector<8x3xf32> to vector<8x1xf32>
    %c1 = arith.constant 1 : index
    %c0_4 = arith.constant 0 : index
    %11 = vector.load %arg2[%c1, %c0_4] : memref<16x128xf32, #tpu.memory_space<vmem>>, vector<1x128xf32>
    %12 = vector.broadcast %10 : vector<8x1xf32> to vector<8x128xf32>
    %13 = vector.broadcast %11 : vector<1x128xf32> to vector<8x128xf32>
    %14 = arith.mulf %12, %13 : vector<8x128xf32>
    %15 = arith.addf %9, %14 : vector<8x128xf32>
    %16 = vector.extract_strided_slice %0 {offsets = [0, 2], sizes = [8, 1], strides = [1, 1]} : vector<8x3xf32> to vector<8x1xf32>
    %c2 = arith.constant 2 : index
    %c0_5 = arith.constant 0 : index
    %17 = vector.load %arg2[%c2, %c0_5] : memref<16x128xf32, #tpu.memory_space<vmem>>, vector<1x128xf32>
    %18 = vector.broadcast %16 : vector<8x1xf32> to vector<8x128xf32>
    %19 = vector.broadcast %17 : vector<1x128xf32> to vector<8x128xf32>
    %20 = arith.mulf %18, %19 : vector<8x128xf32>
    %21 = arith.addf %15, %20 : vector<8x128xf32>
    %cst = arith.constant 0.000000e+00 : f32
    %22 = vector.broadcast %cst : f32 to vector<8x128xf32>
    %23 = arith.maximumf %21, %22 : vector<8x128xf32>
    %c8 = arith.constant 8 : index
    %c0_6 = arith.constant 0 : index
    %24 = vector.load %arg2[%c8, %c0_6] : memref<16x128xf32, #tpu.memory_space<vmem>>, vector<1x128xf32>
    %25 = vector.shape_cast %24 : vector<1x128xf32> to vector<1x128xf32>
    %26 = vector.broadcast %25 : vector<1x128xf32> to vector<8x128xf32>
    %27 = vector.extract_strided_slice %23 {offsets = [0, 0], sizes = [8, 1], strides = [1, 1]} : vector<8x128xf32> to vector<8x1xf32>
    %c4 = arith.constant 4 : index
    %c0_7 = arith.constant 0 : index
    %28 = vector.load %arg2[%c4, %c0_7] : memref<16x128xf32, #tpu.memory_space<vmem>>, vector<1x128xf32>
    %29 = vector.broadcast %27 : vector<8x1xf32> to vector<8x128xf32>
    %30 = vector.broadcast %28 : vector<1x128xf32> to vector<8x128xf32>
    %31 = arith.mulf %29, %30 : vector<8x128xf32>
    %32 = arith.addf %26, %31 : vector<8x128xf32>
    %33 = vector.extract_strided_slice %23 {offsets = [0, 1], sizes = [8, 1], strides = [1, 1]} : vector<8x128xf32> to vector<8x1xf32>
    %c5 = arith.constant 5 : index
    %c0_8 = arith.constant 0 : index
    %34 = vector.load %arg2[%c5, %c0_8] : memref<16x128xf32, #tpu.memory_space<vmem>>, vector<1x128xf32>
    %35 = vector.broadcast %33 : vector<8x1xf32> to vector<8x128xf32>
    %36 = vector.broadcast %34 : vector<1x128xf32> to vector<8x128xf32>
    %37 = arith.mulf %35, %36 : vector<8x128xf32>
    %38 = arith.addf %32, %37 : vector<8x128xf32>
    %39 = vector.extract_strided_slice %23 {offsets = [0, 2], sizes = [8, 1], strides = [1, 1]} : vector<8x128xf32> to vector<8x1xf32>
    %c6 = arith.constant 6 : index
    %c0_9 = arith.constant 0 : index
    %40 = vector.load %arg2[%c6, %c0_9] : memref<16x128xf32, #tpu.memory_space<vmem>>, vector<1x128xf32>
    %41 = vector.broadcast %39 : vector<8x1xf32> to vector<8x128xf32>
    %42 = vector.broadcast %40 : vector<1x128xf32> to vector<8x128xf32>
    %43 = arith.mulf %41, %42 : vector<8x128xf32>
    %44 = arith.addf %38, %43 : vector<8x128xf32>
    %45 = vector.extract_strided_slice %23 {offsets = [0, 3], sizes = [8, 1], strides = [1, 1]} : vector<8x128xf32> to vector<8x1xf32>
    %c7 = arith.constant 7 : index
    %c0_10 = arith.constant 0 : index
    %46 = vector.load %arg2[%c7, %c0_10] : memref<16x128xf32, #tpu.memory_space<vmem>>, vector<1x128xf32>
    %47 = vector.broadcast %45 : vector<8x1xf32> to vector<8x128xf32>
    %48 = vector.broadcast %46 : vector<1x128xf32> to vector<8x128xf32>
    %49 = arith.mulf %47, %48 : vector<8x128xf32>
    %50 = arith.addf %44, %49 : vector<8x128xf32>
    %c0_11 = arith.constant 0 : index
    %c0_12 = arith.constant 0 : index
    %51 = vector.load %arg3[%c0_11, %c0_12] : memref<8x128xf32, #tpu.memory_space<vmem>>, vector<8x128xf32>
    tpu.vector_store %arg3[%c0_11, %c0_12], %50 {strides = array<i32>} : memref<8x128xf32, #tpu.memory_space<vmem>>, vector<8x128xf32>,
    return
  }
  func.func @transform_0(%arg0: i32) -> (i32, i32) {
    %c0_i32 = arith.constant 0 : i32
    %c0_i32_0 = arith.constant 0 : i32
    return %arg0, %c0_i32 : i32, i32
  }
  func.func @transform_1(%arg0: i32) -> (i32, i32) {
    %c0_i32 = arith.constant 0 : i32
    %c0_i32_0 = arith.constant 0 : i32
    %c0_i32_1 = arith.constant 0 : i32
    return %c0_i32, %c0_i32_0 : i32, i32
  }
  func.func @transform_2(%arg0: i32) -> (i32, i32) {
    %c0_i32 = arith.constant 0 : i32
    %c0_i32_0 = arith.constant 0 : i32
    return %arg0, %c0_i32 : i32, i32
  }
}

</mosaic_0001>

<llo_original>
// kernel: tpu_custom_call.1
$region0: #{tpu_custom_call.1}
  #allocation0 [shape = 'u32[]', space=smem, size = 0x4, offset = 0x4, fixed_abs, tag = 'smem constant byte address 0x4 - core index']
  #allocation1 [shape = 'u32[72,128]{1,0:T(1,128)}', space=vmem, size = 0x9000, scoped, tag = 'internal scratch']
  %s0 = inlined_call_operand.vmem [shape: f32[16,3], index: 0, kind: input, shape index: {}]
  %s1 = inlined_call_operand.vmem [shape: f32[16,128], index: 1, kind: input, shape index: {}]
  %s2 = inlined_call_operand.hbm [shape: f32[16,128], index: 2, kind: output, shape index: {}]
  %s3 = sld [smem:[#allocation0]]
  $region41: #{tpu_custom_call.1} parent=0
    _
  %s5 = ssub.s32 1, %s3
  %s6 = scalar_select 0, %s5, %s3
  $region1: #{tpu_custom_call.1} parent=0
    #allocation2 [shape = 'u8[8192]{0}', space=vmem, size = 0x2000, scoped, tag = 'output window, operand 0']
    #allocation3 [shape = 's32[2]{0}', space=sflag, size = 0x8, scoped, tag = 'scoped memory for tpu_custom_call.1']
    %7 = vsyncpa [#allocation3], 0
    %s8 = scalar_lea.sflag [#allocation3], 1
    %9 = vsyncpa %s8, 0
    loop: start=0, step=1, limit=4
    $region2: #{tpu_custom_call.1} parent=1 // loop_pre_header
      _
    $region3: #{tpu_custom_call.1} parent=1 // loop_header
      %s11 = sphi 0, %s15
      %p12 = scmp.ge.s32.totalorder %s11, 4
      %s21 = sphi 0, %s23
      %s24 = sphi 0, %s21
      %s25 = sphi 0, %s24
      %s41 = sphi 0, %s25
      %s45 = sphi 0, %s45
      %s47 = sphi 0, %s45
      %s48 = sphi 0, %s47
      %s62 = sphi 0, %s48
      %s68 = sphi 0, %s70
      %s71 = sphi 0, %s68
      %s72 = sphi 0, %s71
      %s88 = sphi 0, %s72
    $region4: #{tpu_custom_call.1} parent=1 // loop_header_branch
      %14 = sbr.rel (%p12) target = $region8
    $region5: #{tpu_custom_call.1} parent=1 // loop_body
      %s16 = ssub.s32 %s11, 1
      %s17 = ssub.s32 %s11, 2
      %s18 = sadd.s32 %s11, 1
      %s19 = ssub.s32 %s11, %s18
      %p20 = scmp.eq.s32.totalorder %s19, 0
      %s22 = sadd.s32 %s21, 1
      %s23 = scalar_select %p20, %s21, %s22
      %p26 = pneg %p20
      %p27 = scmp.eq.s32.totalorder %s11, 1
      %p28 = por %p26, %p27
      %p29 = scmp.ne.s32.totalorder %s21, %s24
      %p30 = scmp.eq.s32.totalorder %s11, 0
      %p31 = por %p29, %p30
      %p32 = scmp.ne.s32.totalorder %s21, %s24
      %p33 = scmp.eq.s32.totalorder %s16, 1
      %p34 = por %p32, %p33
      %p35 = scmp.ne.s32.totalorder %s24, %s25
      %p36 = scmp.eq.s32.totalorder %s16, 0
      %p37 = por %p35, %p36
      %p38 = scmp.ne.s32.totalorder %s24, %s25
      %p39 = scmp.eq.s32.totalorder %s17, 1
      %p40 = por %p38, %p39
      %p42 = scmp.ne.s32.totalorder %s25, %s41
      %p43 = scmp.eq.s32.totalorder %s17, 0
      %p44 = por %p42, %p43
      %s46 = sadd.s32 %s45, 1
      %p49 = scmp.eq.s32.totalorder %s11, 1
      %p50 = scmp.ne.s32.totalorder %s45, %s47
      %p51 = scmp.eq.s32.totalorder %s11, 0
      %p52 = por %p50, %p51
      %p53 = scmp.ne.s32.totalorder %s45, %s47
      %p54 = scmp.eq.s32.totalorder %s16, 1
      %p55 = por %p53, %p54
      %p56 = scmp.ne.s32.totalorder %s47, %s48
      %p57 = scmp.eq.s32.totalorder %s16, 0
      %p58 = por %p56, %p57
      %p59 = scmp.ne.s32.totalorder %s47, %s48
      %p60 = scmp.eq.s32.totalorder %s17, 1
      %p61 = por %p59, %p60
      %p63 = scmp.ne.s32.totalorder %s48, %s62
      %p64 = scmp.eq.s32.totalorder %s17, 0
      %p65 = por %p63, %p64
      %s66 = ssub.s32 %s11, %s18
      %p67 = scmp.eq.s32.totalorder %s66, 0
      %s69 = sadd.s32 %s68, 1
      %s70 = scalar_select %p67, %s68, %s69
      %p73 = pneg %p67
      %p74 = scmp.eq.s32.totalorder %s11, 1
      %p75 = por %p73, %p74
      %p76 = scmp.ne.s32.totalorder %s68, %s71
      %p77 = scmp.eq.s32.totalorder %s11, 0
      %p78 = por %p76, %p77
      %p79 = scmp.ne.s32.totalorder %s68, %s71
      %p80 = scmp.eq.s32.totalorder %s16, 1
      %p81 = por %p79, %p80
      %p82 = scmp.ne.s32.totalorder %s71, %s72
      %p83 = scmp.eq.s32.totalorder %s16, 0
      %p84 = por %p82, %p83
      %p85 = scmp.ne.s32.totalorder %s71, %s72
      %p86 = scmp.eq.s32.totalorder %s17, 1
      %p87 = por %p85, %p86
      %p89 = scmp.ne.s32.totalorder %s72, %s88
      %p90 = scmp.eq.s32.totalorder %s17, 0
      %p91 = por %p89, %p90
      %p92 = scmp.le.s32.totalorder 1, %s11
      %p93 = scmp.lt.s32.totalorder %s11, 3
      %p94 = pnand %p92, %p93
      %p95 = pneg %p94
      // Predicated region
      $region9: #{tpu_custom_call.1} parent=5 // pred_check
        _
      $region10: #{tpu_custom_call.1} parent=5 // pred_check_branch
        %97 = sbr.rel (%p94) target = $region12
      $region11: #{tpu_custom_call.1} parent=5 // pred_region
        %s98 = ssub.s32 %s11, 1
        // Predicated region
        $region13: #{tpu_custom_call.1} parent=11 // pred_check
          %p99 = pneg %p58
        $region14: #{tpu_custom_call.1} parent=11 // pred_check_branch
          %101 = sbr.rel (%p99) target = $region16
        $region15: #{tpu_custom_call.1} parent=11 // pred_region
          _
        $region16: #{tpu_custom_call.1} parent=11 // pred_fallthru
          _
      $region12: #{tpu_custom_call.1} parent=5 // pred_fallthru
        _
      %p102 = scmp.lt.s32.totalorder %s11, 2
      // Predicated region
      $region17: #{tpu_custom_call.1} parent=5 // pred_check
        %p103 = pneg %p102
      $region18: #{tpu_custom_call.1} parent=5 // pred_check_branch
        %105 = sbr.rel (%p103) target = $region20
      $region19: #{tpu_custom_call.1} parent=5 // pred_region
        // Predicated region
        $region21: #{tpu_custom_call.1} parent=19 // pred_check
          %p106 = pneg %p31
        $region22: #{tpu_custom_call.1} parent=19 // pred_check_branch
          %108 = sbr.rel (%p106) target = $region24
        $region23: #{tpu_custom_call.1} parent=19 // pred_region
          %p109 = scmp.lt.s32.totalorder %s11, 1
          %s110 = scalar_select %p109, %s11, 1
          %s111 = smul.addr %s110, 8
          %s112 = scalar_lea.vmem %s0, %s111
        $region24: #{tpu_custom_call.1} parent=19 // pred_fallthru
          _
      $region20: #{tpu_custom_call.1} parent=5 // pred_fallthru
        _
      %p113 = scmp.le.s32.totalorder 1, %s11
      %p114 = scmp.lt.s32.totalorder %s11, 3
      %p115 = pnand %p113, %p114
      %p116 = pneg %p115
      // Predicated region
      $region25: #{tpu_custom_call.1} parent=5 // pred_check
        _
      $region26: #{tpu_custom_call.1} parent=5 // pred_check_branch
        %118 = sbr.rel (%p115) target = $region28
      $region27: #{tpu_custom_call.1} parent=5 // pred_region
        %s119 = ssub.s32 %s11, 1
        %p120 = scmp.lt.s32.totalorder %s16, 1
        %s121 = scalar_select %p120, %s16, 1
        %s122 = smul.addr %s121, 8
        %s123 = scalar_lea.vmem %s0, %s122
        %p124 = pneg %p37
        %p125 = pneg %p34
        %p126 = pneg %p58
        %p127 = pneg %p55
        %p128 = pneg %p84
        %p129 = pneg %p81
        %s130 = sand.u32 %s71, 1
        %s131 = scalar_lea.sflag [#allocation3], %s130
        %s132 = sand.u32 %s71, 1
        %s133 = smul.addr %s132, 8
        %s134 = scalar_lea.vmem [#allocation2], %s133
        %p135 = scmp.lt.s32.totalorder %s16, 1
        %s136 = scalar_select %p135, %s16, 1
        %s137 = smul.addr %s136, 8
        %s138 = scalar_lea.vmem %s0, %s137
        %v139 = vld [vmem:[%s138] sm:$0xff]
        %v140 = vld [vmem:[%s1 + $0x3] sm:$0x1]
        %v141 = vperm.slane %v140, 0
        %v142 = vld [vmem:[%s1] sm:$0x1]
        %144 = vset.pattern.permute.xlu0 0
        %145 = vperm.xlu0 %144, %v139
        %v146 = vpop.permute.xlu0 %145
        %v148 = vperm.slane %v142, 0
        %v149 = vmul.f32 %v146, %v148
        %v150 = vadd.f32 %v141, %v149
        %v151 = vld [vmem:[%s1 + $0x1] sm:$0x1]
        %152 = vset.pattern.permute.xlu0 1
        %153 = vperm.xlu0 %152, %v139
        %v154 = vpop.permute.xlu0 %153
        %v156 = vperm.slane %v151, 0
        %v157 = vmul.f32 %v154, %v156
        %v158 = vadd.f32 %v150, %v157
        %v159 = vld [vmem:[%s1 + $0x2] sm:$0x1]
        %160 = vset.pattern.permute.xlu0 2
        %161 = vperm.xlu0 %160, %v139
        %v162 = vpop.permute.xlu0 %161
        %v164 = vperm.slane %v159, 0
        %v165 = vmul.f32 %v162, %v164
        %v166 = vadd.f32 %v158, %v165
        %v167 = vmax.f32 %v166, 0.0
        %v168 = vld [vmem:[%s1 + $0x8] sm:$0x1]
        %v169 = vperm.slane %v168, 0
        %v170 = vld [vmem:[%s1 + $0x4] sm:$0x1]
        %172 = vset.pattern.permute.xlu0 0
        %173 = vperm.xlu0 %172, %v167
        %v174 = vpop.permute.xlu0 %173
        %v176 = vperm.slane %v170, 0
        %v177 = vmul.f32 %v174, %v176
        %v178 = vadd.f32 %v169, %v177
        %v179 = vld [vmem:[%s1 + $0x5] sm:$0x1]
        %180 = vset.pattern.permute.xlu0 1
        %181 = vperm.xlu0 %180, %v167
        %v182 = vpop.permute.xlu0 %181
        %v184 = vperm.slane %v179, 0
        %v185 = vmul.f32 %v182, %v184
        %v186 = vadd.f32 %v178, %v185
        %v187 = vld [vmem:[%s1 + $0x6] sm:$0x1]
        %188 = vset.pattern.permute.xlu0 2
        %189 = vperm.xlu0 %188, %v167
        %v190 = vpop.permute.xlu0 %189
        %v192 = vperm.slane %v187, 0
        %v193 = vmul.f32 %v190, %v192
        %v194 = vadd.f32 %v186, %v193
        %v195 = vld [vmem:[%s1 + $0x7] sm:$0x1]
        %196 = vset.pattern.permute.xlu0 3
        %197 = vperm.xlu0 %196, %v167
        %v198 = vpop.permute.xlu0 %197
        %v200 = vperm.slane %v195, 0
        %v201 = vmul.f32 %v198, %v200
        %v202 = vadd.f32 %v194, %v201
        %203 = vst [vmem:[%s134] sm:$0xff] %v202
        %s204 = sand.u32 %s71, 1
        %s205 = scalar_lea.sflag [#allocation3], %s204
        %s206 = sand.u32 %s71, 1
        %s207 = smul.addr %s206, 8
        %s208 = scalar_lea.vmem [#allocation2], %s207
        // Predicated region
        $region29: #{tpu_custom_call.1} parent=27 // pred_check
          %p209 = pneg %p81
        $region30: #{tpu_custom_call.1} parent=27 // pred_check_branch
          %211 = sbr.rel (%p209) target = $region32
        $region31: #{tpu_custom_call.1} parent=27 // pred_region
          %213 = vsyncadd %s205, 0
          %s214 = smul.addr %s16, 8
          %s215 = scalar_lea.hbm %s2, %s214
          %s217 = sshll.u32 %s208, 4
          %s218 = int_to_ptr.vmem [resolvable:$true] %s217
          %s219 = sshll.u32 %s215, 4
          %s220 = int_to_ptr.hbm [resolvable:$true] %s219
          %222 = dma.vmem_to_hbm [thread:$0]  %s218, 128, %s220, %s205
        $region32: #{tpu_custom_call.1} parent=27 // pred_fallthru
          _
      $region28: #{tpu_custom_call.1} parent=5 // pred_fallthru
        _
      %p223 = scmp.le.s32.totalorder 2, %s11
      // Predicated region
      $region33: #{tpu_custom_call.1} parent=5 // pred_check
        %p224 = pneg %p223
      $region34: #{tpu_custom_call.1} parent=5 // pred_check_branch
        %226 = sbr.rel (%p224) target = $region36
      $region35: #{tpu_custom_call.1} parent=5 // pred_region
        %s227 = ssub.s32 %s11, 2
        // Predicated region
        $region37: #{tpu_custom_call.1} parent=35 // pred_check
          %p228 = pneg %p87
        $region38: #{tpu_custom_call.1} parent=35 // pred_check_branch
          %230 = sbr.rel (%p228) target = $region40
        $region39: #{tpu_custom_call.1} parent=35 // pred_region
          %s231 = sand.u32 %s72, 1
          %s232 = scalar_lea.sflag [#allocation3], %s231
          %s233 = sand.u32 %s72, 1
          %s234 = smul.addr %s233, 8
          %s235 = scalar_lea.vmem [#allocation2], %s234
          %237 = dma.done %s232, 128
        $region40: #{tpu_custom_call.1} parent=35 // pred_fallthru
          _
      $region36: #{tpu_custom_call.1} parent=5 // pred_fallthru
        _
    $region6: #{tpu_custom_call.1} parent=1 // loop_footer
      %s15 = sadd.s32 1, %s11
    $region7: #{tpu_custom_call.1} parent=1 // loop_footer_branch
      %10 = sbr.rel target = $region3
    $region8: #{tpu_custom_call.1} parent=1 // loop_exit
      _
    %238 = vsyncpa [#allocation3], 1
    %s239 = scalar_lea.sflag [#allocation3], 1
    %240 = vsyncpa %s239, 1

</llo_original>
